<compile_context>
chip_gen: v6e
topology: v6e:2x2x1
jax: 0.10.0
libtpu: 0.0.40
codegen_flags: <defaults>
</compile_context>

<pallas_src>
import functools

import jax
import jax.numpy as jnp
from jax.experimental import pallas as pl
from jax.experimental.pallas import tpu as pltpu

# Model configuration (mirrors embedding_sizes passed to BaseModel.__init__)
EMBEDDING_SIZES = [(11, 8), (23, 16), (7, 8)]     # (unique_size, embedding_dim)
N_FEATURES = len(EMBEDDING_SIZES)
INPUT_DIM = sum(d for _, d in EMBEDDING_SIZES)    # 32
HIDDEN = 64
TOTAL_VOCAB = sum(v for v, _ in EMBEDDING_SIZES)  # 41
V_PAD = 128                                       # pad stacked vocab to a full 128-lane width
# row offset of each feature's vocab block inside the stacked fused table
VOCAB_OFFSETS = tuple(int(sum(v for v, _ in EMBEDDING_SIZES[:i])) for i in range(N_FEATURES))

BATCH = 8


def _round_up(x, m):
    return ((x + m - 1) // m) * m


def base_model_kernel(idx_ref, fused_ref, b1_ref, w2_ref, b2_ref, o_ref):
    """One batch tile: multi_hot @ fused_table + b1 -> ReLU -> <.,w2> + b2 -> sigmoid."""
    idx = idx_ref[...]                          # (tb, N_FEATURES) int32, loaded once
    tb = idx.shape[0]

    # Single multi-hot over the stacked (offset) vocab.  The per-feature one-hot
    # ranges are disjoint, so OR-ing the masks and doing ONE matmul equals
    # sum_i(one_hot_i @ fused_table_i) = concat(embeddings) @ W1.
    iota = jax.lax.broadcasted_iota(jnp.int32, (tb, V_PAD), 1)
    hit = iota == (idx[:, 0:1] + VOCAB_OFFSETS[0])
    for c in range(1, N_FEATURES):
        hit = jnp.logical_or(hit, iota == (idx[:, c:c + 1] + VOCAB_OFFSETS[c]))
    multi_hot = hit.astype(jnp.float32)         # (tb, V_PAD)

    # First Linear (tables pre-fused into the weight): one MXU pass.
    z1 = jnp.dot(multi_hot, fused_ref[...], preferred_element_type=jnp.float32)
    z1 = z1 + b1_ref[...]
    a1 = jnp.maximum(z1, 0.0)                   # ReLU

    # Second Linear (64 -> 1): VPU multiply + lane reduction, keeps the MXU free
    # and avoids a 1-lane MXU result pop.
    z2 = jnp.sum(a1 * w2_ref[...], axis=-1, keepdims=True) + b2_ref[...]

    # Sigmoid: exp (EUP) + approximate reciprocal (EUP), no exact-divide sequence.
    o_ref[...] = pl.reciprocal(1.0 + jnp.exp(-z2), approx=True)


def fuse_params(tables, w1):
    """Host-side, once: fold each embedding table through its W1 row block and stack."""
    fused_rows = []
    r0 = 0
    for t in tables:
        _, d = t.shape
        fused_rows.append(t.astype(jnp.float32) @ w1[r0:r0 + d])   # (vocab_i, HIDDEN)
        r0 += d
    stacked = jnp.concatenate(fused_rows, axis=0)                  # (TOTAL_VOCAB, HIDDEN)
    return jnp.pad(stacked, ((0, V_PAD - stacked.shape[0]), (0, 0)))


@functools.partial(jax.jit, static_argnames=("tile_b",))
def base_model_forward(inputs, fused_table, b1_row, w2_row, b2, tile_b=512):
    """inputs: [B, n_features] int32; returns [B, 1] float32 probabilities."""
    B, n_feat = inputs.shape
    tb = _round_up(min(tile_b, _round_up(B, 8)), 8)
    b_pad = _round_up(B, tb)
    if b_pad != B:
        # pad with index 0 (always valid); padded rows are sliced off below
        inputs = jnp.pad(inputs, ((0, b_pad - B), (0, 0)))

    out = pl.pallas_call(
        base_model_kernel,
        out_shape=jax.ShapeDtypeStruct((b_pad, 1), jnp.float32),
        grid=(b_pad // tb,),
        in_specs=[
            pl.BlockSpec((tb, n_feat), lambda i: (i, 0)),      # batch-tiled indices
            pl.BlockSpec((V_PAD, HIDDEN), lambda i: (0, 0)),   # fused table, resident
            pl.BlockSpec((1, HIDDEN), lambda i: (0, 0)),       # b1
            pl.BlockSpec((1, HIDDEN), lambda i: (0, 0)),       # w2 row
            pl.BlockSpec((1, 1), lambda i: (0, 0)),            # b2
        ],
        out_specs=pl.BlockSpec((tb, 1), lambda i: (i, 0)),
        compiler_params=pltpu.CompilerParams(
            dimension_semantics=("parallel",)),                # batch axis -> megacore
    )(inputs, fused_table, b1_row, w2_row, b2)
    return out[:B]


def init_params(key):
    keys = jax.random.split(key, N_FEATURES + 2)
    tables = tuple(
        jax.random.normal(keys[i], (v, d), jnp.float32) * 0.1
        for i, (v, d) in enumerate(EMBEDDING_SIZES)
    )
    w1 = jax.random.normal(keys[-2], (INPUT_DIM, HIDDEN), jnp.float32) * 0.1
    b1 = jnp.zeros((1, HIDDEN), jnp.float32)
    w2 = jax.random.normal(keys[-1], (HIDDEN, 1), jnp.float32) * 0.1
    b2 = jnp.zeros((1, 1), jnp.float32)
    return tables, w1, b1, w2, b2


def reference_forward(inputs, tables, w1, b1, w2, b2):
    embs = [jnp.take(t, inputs[:, i], axis=0) for i, t in enumerate(tables)]
    h = jnp.concatenate(embs, axis=1)
    a1 = jnp.maximum(h @ w1 + b1, 0.0)
    return jax.nn.sigmoid(a1 @ w2 + b2)


if __name__ == "__main__":
    key = jax.random.PRNGKey(0)
    k_idx, k_params = jax.random.split(key)
    tables, w1, b1, w2, b2 = init_params(k_params)

    # categorical inputs: column i indexes embedding table i
    cols = []
    idx_keys = jax.random.split(k_idx, N_FEATURES)
    for (vocab, _), kk in zip(EMBEDDING_SIZES, idx_keys):
        cols.append(jax.random.randint(kk, (BATCH, 1), 0, vocab, dtype=jnp.int32))
    inputs = jnp.concatenate(cols, axis=1)      # (BATCH, 3) int32

    # one-time host-side parameter fusion (embedding tables folded through W1)
    fused_table = fuse_params(tables, w1)       # (V_PAD, HIDDEN)
    w2_row = w2.T                               # (1, HIDDEN)

    out = base_model_forward(inputs, fused_table, b1, w2_row, b2)
    out = jax.block_until_ready(out)

    ref = reference_forward(inputs, tables, w1, b1, w2, b2)
    assert out.shape == (BATCH, 1)
    # approximate EUP reciprocal in the sigmoid -> slightly looser tolerance than 1e-5
    assert jnp.allclose(out, ref, atol=5e-3, rtol=5e-3), float(jnp.max(jnp.abs(out - ref)))

    print("KERNEL_OK")
</pallas_src>

<mosaic_0001>
module attributes {stable_mosaic.version = 11 : i64} {
  func.func @base_model_kernel(%arg0: i32, %arg1: memref<8x3xi32, #tpu.memory_space<vmem>>, %arg2: memref<128x64xf32, #tpu.memory_space<vmem>>, %arg3: memref<1x64xf32, #tpu.memory_space<vmem>>, %arg4: memref<1x64xf32, #tpu.memory_space<vmem>>, %arg5: memref<1x1xf32, #tpu.memory_space<vmem>>, %arg6: memref<8x1xf32, #tpu.memory_space<vmem>>) attributes {dimension_semantics = [#tpu.dimension_semantics<parallel>], iteration_bounds = array<i64: 1>, scalar_prefetch = 0 : i64, scratch_operands = 0 : i64, tpu.core_type = #tpu.core_type<tc>, window_params = [{transform_indices = @transform_0, window_bounds = array<i64: 8, 3>}, {pipeline_mode = #tpu.pipeline_mode<synchronous>, transform_indices = @transform_1, window_bounds = array<i64: 128, 64>}, {pipeline_mode = #tpu.pipeline_mode<synchronous>, transform_indices = @transform_2, window_bounds = array<i64: 1, 64>}, {pipeline_mode = #tpu.pipeline_mode<synchronous>, transform_indices = @transform_3, window_bounds = array<i64: 1, 64>}, {pipeline_mode = #tpu.pipeline_mode<synchronous>, transform_indices = @transform_4, window_bounds = array<i64: 1, 1>}, {transform_indices = @transform_5, window_bounds = array<i64: 8, 1>}]} {
    %c0 = arith.constant 0 : index
    %c0_0 = arith.constant 0 : index
    %0 = vector.load %arg1[%c0, %c0_0] : memref<8x3xi32, #tpu.memory_space<vmem>>, vector<8x3xi32>
    %1 = tpu.iota {dimensions = array<i32: 1>} : vector<8x128xi32>
    %2 = vector.extract_strided_slice %0 {offsets = [0, 0], sizes = [8, 1], strides = [1, 1]} : vector<8x3xi32> to vector<8x1xi32>
    %c0_i32 = arith.constant 0 : i32
    %3 = vector.broadcast %c0_i32 : i32 to vector<8x1xi32>
    %4 = arith.addi %2, %3 : vector<8x1xi32>
    %5 = vector.broadcast %4 : vector<8x1xi32> to vector<8x128xi32>
    %6 = arith.cmpi eq, %1, %5 : vector<8x128xi32>
    %7 = vector.extract_strided_slice %0 {offsets = [0, 1], sizes = [8, 1], strides = [1, 1]} : vector<8x3xi32> to vector<8x1xi32>
    %c11_i32 = arith.constant 11 : i32
    %8 = vector.broadcast %c11_i32 : i32 to vector<8x1xi32>
    %9 = arith.addi %7, %8 : vector<8x1xi32>
    %10 = vector.broadcast %9 : vector<8x1xi32> to vector<8x128xi32>
    %11 = arith.cmpi eq, %1, %10 : vector<8x128xi32>
    %12 = arith.ori %6, %11 : vector<8x128xi1>
    %13 = vector.extract_strided_slice %0 {offsets = [0, 2], sizes = [8, 1], strides = [1, 1]} : vector<8x3xi32> to vector<8x1xi32>
    %c34_i32 = arith.constant 34 : i32
    %14 = vector.broadcast %c34_i32 : i32 to vector<8x1xi32>
    %15 = arith.addi %13, %14 : vector<8x1xi32>
    %16 = vector.broadcast %15 : vector<8x1xi32> to vector<8x128xi32>
    %17 = arith.cmpi eq, %1, %16 : vector<8x128xi32>
    %18 = arith.ori %12, %17 : vector<8x128xi1>
    %19 = arith.extui %18 : vector<8x128xi1> to vector<8x128xi32>
    %20 = arith.sitofp %19 : vector<8x128xi32> to vector<8x128xf32>
    %c0_1 = arith.constant 0 : index
    %c0_2 = arith.constant 0 : index
    %21 = vector.load %arg2[%c0_1, %c0_2] : memref<128x64xf32, #tpu.memory_space<vmem>>, vector<128x64xf32>
    %cst = arith.constant dense<0.000000e+00> : vector<8x64xf32>
    %22 = tpu.matmul %20, %21, %cst {dimension_numbers = #tpu.dot_dimension_numbers<[1], [0], [0], [1], [0, 0, 1, 1], [], []>} : vector<8x128xf32>, vector<128x64xf32>, vector<8x64xf32> -> vector<8x64xf32>
    %c0_3 = arith.constant 0 : index
    %c0_4 = arith.constant 0 : index
    %23 = vector.load %arg3[%c0_3, %c0_4] : memref<1x64xf32, #tpu.memory_space<vmem>>, vector<1x64xf32>
    %24 = vector.broadcast %23 : vector<1x64xf32> to vector<8x64xf32>
    %25 = arith.addf %22, %24 : vector<8x64xf32>
    %cst_5 = arith.constant 0.000000e+00 : f32
    %26 = vector.broadcast %cst_5 : f32 to vector<8x64xf32>
    %27 = arith.maximumf %25, %26 : vector<8x64xf32>
    %c0_6 = arith.constant 0 : index
    %c0_7 = arith.constant 0 : index
    %28 = vector.load %arg4[%c0_6, %c0_7] : memref<1x64xf32, #tpu.memory_space<vmem>>, vector<1x64xf32>
    %29 = vector.broadcast %28 : vector<1x64xf32> to vector<8x64xf32>
    %30 = arith.mulf %27, %29 : vector<8x64xf32>
    %cst_8 = arith.constant dense<0.000000e+00> : vector<8xf32>
    %31 = vector.multi_reduction <add>, %30, %cst_8 [1] : vector<8x64xf32> to vector<8xf32>
    %32 = vector.shape_cast %31 : vector<8xf32> to vector<8x1xf32>
    %c0_9 = arith.constant 0 : index
    %c0_10 = arith.constant 0 : index
    %33 = vector.load %arg5[%c0_9, %c0_10] : memref<1x1xf32, #tpu.memory_space<vmem>>, vector<1x1xf32>
    %34 = vector.broadcast %33 : vector<1x1xf32> to vector<8x1xf32>
    %35 = arith.addf %32, %34 : vector<8x1xf32>
    %cst_11 = arith.constant 0.000000e+00 : f32
    %36 = vector.broadcast %cst_11 : f32 to vector<8x1xf32>
    %37 = arith.subf %36, %35 : vector<8x1xf32>
    %38 = math.exp %37 : vector<8x1xf32>
    %cst_12 = arith.constant 1.000000e+00 : f32
    %39 = vector.broadcast %cst_12 : f32 to vector<8x1xf32>
    %40 = arith.addf %39, %38 : vector<8x1xf32>
    %41 = tpu.reciprocal %40 {approx = true} : vector<8x1xf32> -> vector<8x1xf32>
    %c0_13 = arith.constant 0 : index
    %c0_14 = arith.constant 0 : index
    %42 = vector.load %arg6[%c0_13, %c0_14] : memref<8x1xf32, #tpu.memory_space<vmem>>, vector<8x1xf32>
    tpu.vector_store %arg6[%c0_13, %c0_14], %41 {strides = array<i32>} : memref<8x1xf32, #tpu.memory_space<vmem>>, vector<8x1xf32>,
    return
  }
  func.func @transform_0(%arg0: i32) -> (i32, i32) {
    %c0_i32 = arith.constant 0 : i32
    %c0_i32_0 = arith.constant 0 : i32
    return %arg0, %c0_i32 : i32, i32
  }
  func.func @transform_1(%arg0: i32) -> (i32, i32) {
    %c0_i32 = arith.constant 0 : i32
    %c0_i32_0 = arith.constant 0 : i32
    %c0_i32_1 = arith.constant 0 : i32
    return %c0_i32, %c0_i32_0 : i32, i32
  }
  func.func @transform_2(%arg0: i32) -> (i32, i32) {
    %c0_i32 = arith.constant 0 : i32
    %c0_i32_0 = arith.constant 0 : i32
    %c0_i32_1 = arith.constant 0 : i32
    return %c0_i32, %c0_i32_0 : i32, i32
  }
  func.func @transform_3(%arg0: i32) -> (i32, i32) {
    %c0_i32 = arith.constant 0 : i32
    %c0_i32_0 = arith.constant 0 : i32
    %c0_i32_1 = arith.constant 0 : i32
    return %c0_i32, %c0_i32_0 : i32, i32
  }
  func.func @transform_4(%arg0: i32) -> (i32, i32) {
    %c0_i32 = arith.constant 0 : i32
    %c0_i32_0 = arith.constant 0 : i32
    %c0_i32_1 = arith.constant 0 : i32
    return %c0_i32, %c0_i32_0 : i32, i32
  }
  func.func @transform_5(%arg0: i32) -> (i32, i32) {
    %c0_i32 = arith.constant 0 : i32
    %c0_i32_0 = arith.constant 0 : i32
    return %arg0, %c0_i32 : i32, i32
  }
}

</mosaic_0001>

<llo_original>
// kernel: base_model_forward.1
$region0: #{base_model_forward.1}
  #allocation0 [shape = 'u32[]', space=smem, size = 0x4, offset = 0x4, fixed_abs, tag = 'smem constant byte address 0x4 - core index']
  #allocation1 [shape = 'u32[144,128]{1,0:T(1,128)}', space=vmem, size = 0x12000, scoped, tag = 'internal scratch']
  #allocation2 [shape = 'f32[1,1]{1,0:T(1,128)S(1)}', space=vmem, size = 0x200, scoped, tag = 'scoped memory for base_model_forward.1']
  %s0 = inlined_call_operand.vmem [shape: s32[8,3], index: 0, kind: input, shape index: {}]
  %s1 = inlined_call_operand.vmem [shape: f32[128,64], index: 1, kind: input, shape index: {}]
  %s2 = inlined_call_operand.vmem [shape: f32[1,64], index: 2, kind: input, shape index: {}]
  %s3 = inlined_call_operand.vmem [shape: f32[1,64], index: 3, kind: input, shape index: {}]
  %s4 = inlined_call_operand.<no memory space> [shape: f32[1,1], index: 4, kind: input, shape index: {}]
  %s5 = inlined_call_operand.vmem [shape: f32[8,1], index: 5, kind: output, shape index: {}]
  %s6 = sld [smem:[#allocation0]]
  $region30: #{base_model_forward.1} parent=0
    _
  %s8 = ssub.s32 1, %s6
  %s9 = scalar_select 0, %s8, %s6
  %v10 = vstv %s4
  %11 = vst [vmem:[#allocation2] sm:$0x1] %v10
  // Predicated region
  $region2: #{base_model_forward.1} parent=0 // pred_check
    _
  $region3: #{base_model_forward.1} parent=0 // pred_check_branch
    %13 = sbr.rel (0) target = $region5
  $region4: #{base_model_forward.1} parent=0 // pred_region
    _
  $region5: #{base_model_forward.1} parent=0 // pred_fallthru
    _
  // Predicated region
  $region6: #{base_model_forward.1} parent=0 // pred_check
    _
  $region7: #{base_model_forward.1} parent=0 // pred_check_branch
    %15 = sbr.rel (0) target = $region9
  $region8: #{base_model_forward.1} parent=0 // pred_region
    _
  $region9: #{base_model_forward.1} parent=0 // pred_fallthru
    _
  // Predicated region
  $region10: #{base_model_forward.1} parent=0 // pred_check
    _
  $region11: #{base_model_forward.1} parent=0 // pred_check_branch
    %17 = sbr.rel (0) target = $region13
  $region12: #{base_model_forward.1} parent=0 // pred_region
    _
  $region13: #{base_model_forward.1} parent=0 // pred_fallthru
    _
  // Predicated region
  $region14: #{base_model_forward.1} parent=0 // pred_check
    _
  $region15: #{base_model_forward.1} parent=0 // pred_check_branch
    %19 = sbr.rel (0) target = $region17
  $region16: #{base_model_forward.1} parent=0 // pred_region
    _
  $region17: #{base_model_forward.1} parent=0 // pred_fallthru
    _
  // Predicated region
  $region18: #{base_model_forward.1} parent=0 // pred_check
    _
  $region19: #{base_model_forward.1} parent=0 // pred_check_branch
    %21 = sbr.rel (0) target = $region21
  $region20: #{base_model_forward.1} parent=0 // pred_region
    _
  $region21: #{base_model_forward.1} parent=0 // pred_fallthru
    _
  %v22 = vld [vmem:[%s0] sm:$0xff]
  %v23 = vlaneseq
  %v24 = vand.u32 %v23, 127
  %25 = vset.pattern.permute.xlu0 0
  %26 = vperm.xlu0 %25, %v22
  %v27 = vpop.permute.xlu0 %26
  %vm28 = vcmp.eq.s32.totalorder %v24, %v27
  %v29 = vadd.s32 %v22, 11
  %30 = vset.pattern.permute.xlu0 1
  %31 = vperm.xlu0 %30, %v29
  %v32 = vpop.permute.xlu0 %31
  %vm33 = vcmp.eq.s32.totalorder %v24, %v32
  %vm34 = vmor %vm28, %vm33
  %v35 = vadd.s32 %v22, 34
  %36 = vset.pattern.permute.xlu0 2
  %37 = vperm.xlu0 %36, %v35
  %v38 = vpop.permute.xlu0 %37
  %vm39 = vcmp.eq.s32.totalorder %v24, %v38
  %vm40 = vmor %vm34, %vm39
  %v41 = vsel %vm40, 1, 0
  %v42 = vcvt.s32.f32 %v41
  %v43 = vld [vmem:[%s1] sm:$0xff]
  %v44 = vld [vmem:[%s1 + $0x8] sm:$0xff]
  %v45 = vld [vmem:[%s1 + $0x10] sm:$0xff]
  %v46 = vld [vmem:[%s1 + $0x18] sm:$0xff]
  %v47 = vld [vmem:[%s1 + $0x20] sm:$0xff]
  %v48 = vld [vmem:[%s1 + $0x28] sm:$0xff]
  %v49 = vld [vmem:[%s1 + $0x30] sm:$0xff]
  %v50 = vld [vmem:[%s1 + $0x38] sm:$0xff]
  %v51 = vld [vmem:[%s1 + $0x40] sm:$0xff]
  %v52 = vld [vmem:[%s1 + $0x48] sm:$0xff]
  %v53 = vld [vmem:[%s1 + $0x50] sm:$0xff]
  %v54 = vld [vmem:[%s1 + $0x58] sm:$0xff]
  %v55 = vld [vmem:[%s1 + $0x60] sm:$0xff]
  %v56 = vld [vmem:[%s1 + $0x68] sm:$0xff]
  %v57 = vld [vmem:[%s1 + $0x70] sm:$0xff]
  %v58 = vld [vmem:[%s1 + $0x78] sm:$0xff]
  %v59 = vld [vmem:[%s2] sm:$0x1]
  %v61 = vlaneseq
  %v62 = vshrl.u32 %v61, 7
  %v63 = vsub.s32 0, %v62
  %v64 = vrot.slane %v59, %v63
  %66 = vmatprep.subr.mxu0 0.0
  %67 = vmatpush1.msra.mxu0 %v58
  %68 = vmatprep.subr.mxu0 0.0
  %69 = vmatpush1.msra.mxu0 %v57
  %70 = vmatprep.subr.mxu0 0.0
  %71 = vmatpush1.msra.mxu0 %v56
  %72 = vmatprep.subr.mxu0 0.0
  %73 = vmatpush1.msra.mxu0 %v55
  %74 = vmatprep.subr.mxu0 0.0
  %75 = vmatpush1.msra.mxu0 %v54
  %76 = vmatprep.subr.mxu0 0.0
  %77 = vmatpush1.msra.mxu0 %v53
  %78 = vmatprep.subr.mxu0 0.0
  %79 = vmatpush1.msra.mxu0 %v52
  %80 = vmatprep.subr.mxu0 0.0
  %81 = vmatpush1.msra.mxu0 %v51
  %82 = vmatprep.subr.mxu0 0.0
  %83 = vmatpush1.msra.mxu0 %v50
  %84 = vmatprep.subr.mxu0 0.0
  %85 = vmatpush1.msra.mxu0 %v49
  %86 = vmatprep.subr.mxu0 0.0
  %87 = vmatpush1.msra.mxu0 %v48
  %88 = vmatprep.subr.mxu0 0.0
  %89 = vmatpush1.msra.mxu0 %v47
  %90 = vmatprep.subr.mxu0 0.0
  %91 = vmatpush1.msra.mxu0 %v46
  %92 = vmatprep.subr.mxu0 0.0
  %93 = vmatpush1.msra.mxu0 %v45
  %94 = vmatprep.subr.mxu0 0.0
  %95 = vmatpush1.msra.mxu0 %v44
  %96 = vmatprep.subr.mxu0 0.0
  %97 = vmatpush1.msra.mxu0 %v43
  %98 = vmatprep.subr.mxu0 0.0
  %99 = vmatpush2.msra.mxu0 0.0
  %100 = vmatprep.subr.mxu0 0.0
  %101 = vmatpush2.msra.mxu0 0.0
  %102 = vmatprep.subr.mxu0 0.0
  %103 = vmatpush2.msra.mxu0 0.0
  %104 = vmatprep.subr.mxu0 0.0
  %105 = vmatpush2.msra.mxu0 0.0
  %106 = vmatprep.subr.mxu0 0.0
  %107 = vmatpush2.msra.mxu0 0.0
  %108 = vmatprep.subr.mxu0 0.0
  %109 = vmatpush2.msra.mxu0 0.0
  %110 = vmatprep.subr.mxu0 0.0
  %111 = vmatpush2.msra.mxu0 0.0
  %112 = vmatprep.subr.mxu0 0.0
  %113 = vmatpush2.msra.mxu0 0.0
  %114 = vmatprep.subr.mxu0 0.0
  %115 = vmatpush2.msra.mxu0 0.0
  %116 = vmatprep.subr.mxu0 0.0
  %117 = vmatpush2.msra.mxu0 0.0
  %118 = vmatprep.subr.mxu0 0.0
  %119 = vmatpush2.msra.mxu0 0.0
  %120 = vmatprep.subr.mxu0 0.0
  %121 = vmatpush2.msra.mxu0 0.0
  %122 = vmatprep.subr.mxu0 0.0
  %123 = vmatpush2.msra.mxu0 0.0
  %124 = vmatprep.subr.mxu0 0.0
  %125 = vmatpush2.msra.mxu0 0.0
  %126 = vmatprep.subr.mxu0 0.0
  %127 = vmatpush2.msra.mxu0 0.0
  %128 = vmatprep.subr.mxu0 0.0
  %129 = vmatpush2.msra.mxu0 0.0
  %130 = vmatprep.mubr.f32.mxu0 0.0
  %131 = vmatmul.mubr.f32.gmra.mxu0 %v42
  %v132 = vpop.f32.mrf.mxu0
  %v133 = vadd.f32 %v64, %v132
  %v134 = vpop.f32.mrf.mxu0
  %135 = vdwg.mxu0
  %v136 = vmax.f32 %v133, 0.0
  %v137 = vld [vmem:[%s3] sm:$0x1]
  %v139 = vlaneseq
  %v140 = vshrl.u32 %v139, 7
  %v141 = vsub.s32 0, %v140
  %v142 = vrot.slane %v137, %v141
  %v144 = vmul.f32 %v136, %v142
  %vm145 = vcmask 523264
  %v146 = vsel %vm145, %v144, 0.0
  %147 = vadd.xlane.f32.xlu0 %v146
  %v148 = vpop.xlane.xlu0 %147
  %v149 = vld [vmem:[#allocation2] sm:$0x1]
  %v151 = vlaneseq
  %v152 = vshrl.u32 %v151, 7
  %v153 = vsub.s32 0, %v152
  %v154 = vrot.slane %v149, %v153
  %v156 = vadd.f32 %v148, %v154
  %v157 = vsub.f32 0.0, %v156
  %v158 = vmul.f32 %v157, 1.442695
  %v159 = vpow.pop %v158
  %v160 = vadd.f32 %v159, 1.0
  %v161 = vrcp.pop %v160
  %vm162 = vcmask 7168
  %163 = vst.msk [vmem:[%s5] sm:$0xff] %vm162, %v161
  // Predicated region
  $region22: #{base_model_forward.1} parent=0 // pred_check
    _
  $region23: #{base_model_forward.1} parent=0 // pred_check_branch
    %165 = sbr.rel (0) target = $region25
  $region24: #{base_model_forward.1} parent=0 // pred_region
    _
  $region25: #{base_model_forward.1} parent=0 // pred_fallthru
    _
  // Predicated region
  $region26: #{base_model_forward.1} parent=0 // pred_check
    _
  $region27: #{base_model_forward.1} parent=0 // pred_check_branch
    %167 = sbr.rel (0) target = $region29
  $region28: #{base_model_forward.1} parent=0 // pred_region
    _
  $region29: #{base_model_forward.1} parent=0 // pred_fallthru
    _

</llo_original>
